<compile_context>
chip_gen: v6e
topology: v6e:2x2x1
jax: 0.10.0
libtpu: 0.0.40
codegen_flags: <defaults>
</compile_context>

<pallas_src>
import jax
import jax.numpy as jnp
from jax.experimental import pallas as pl
from jax.experimental.pallas import tpu as pltpu

LANE = 128
SUB = 8


def _round_up(x, m):
    return (x + m - 1) // m * m


# ---------------------------------------------------------------------------
# Kernel 1: per-channel edge transform  h_e[c] = edge_feats[c] @ We[c].T + be[c]
# (nn.Dropout is identity in eval mode).  Result cached in bf16 for the MXU.
# ---------------------------------------------------------------------------
def edge_transform_kernel(efeat_ref, WeT_ref, be_ref, he_ref):
    he = jnp.dot(efeat_ref[0], WeT_ref[0],
                 preferred_element_type=jnp.float32) + be_ref[0]
    he_ref[0] = he.astype(jnp.bfloat16)


# ---------------------------------------------------------------------------
# Kernel 2: edge-softmax aggregation + ELU + concat Linears (split-K over the
# 3 channels) + GRUCell + ReLU, tiled over destination nodes.
# ---------------------------------------------------------------------------
def attentive_gru1_kernel(
    A_ref,        # (TN, Ep)      bf16 one-hot dst incidence tile
    logit_ref,    # (1, 1, Ep)    f32  edge logits for channel c
    he_ref,       # (1, Ep, Hp)   bf16 transformed edge features, channel c
    nfeat_ref,    # (1, TN, Hp)   bf16 node features for channel c
    WaT_ref,      # (1, Hp, Hp)   bf16 multi_to_cat_attention, K-block c
    ba_ref,       # (1, Hp)       f32
    WnT_ref,      # (1, Hp, Hp)   bf16 multi_to_cat_node, K-block c
    bn_ref,       # (1, Hp)       f32
    WihT_ref,     # (Hp, 3*Nfp)   bf16 GRU weight_ih.T, gates r|z|n on lanes
    WhhT_ref,     # (Nfp, 3*Nfp)  bf16 GRU weight_hh.T, gates r|z|n on lanes
    bih_ref,      # (1, 3*Nfp)    f32
    bhh_ref,      # (1, 3*Nfp)    f32
    out_ref,      # (TN, Nfp)     f32
    ctx_acc,      # scratch (TN, Hp) f32
    node_acc,     # scratch (TN, Hp) f32
):
    f32 = jnp.float32
    bf16 = jnp.bfloat16
    c = pl.program_id(1)
    nc = pl.num_programs(1)

    @pl.when(c == 0)
    def _():
        ctx_acc[...] = jnp.zeros_like(ctx_acc)
        node_acc[...] = jnp.zeros_like(node_acc)

    # --- edge_softmax grouped by destination node (rows of A), f32 math ---
    A = A_ref[...]                                     # (TN, Ep)
    logit = logit_ref[0]                               # (1, Ep)
    masked = jnp.where(A > 0, logit, f32(-1e30))       # (TN, Ep)
    m = jnp.max(masked, axis=1, keepdims=True)         # (TN, 1)
    ex = jnp.exp(masked - m)                           # off-graph entries -> 0
    denom = jnp.sum(ex, axis=1, keepdims=True)
    inv = jnp.where(m > f32(-1e29),                    # guard isolated rows
                    pl.reciprocal(denom, approx=True), 0.0)
    alpha = (ex * inv).astype(bf16)                    # (TN, Ep)

    # --- update_all(copy_edge, sum): attention-weighted sum + ELU ---
    ctx = jnp.dot(alpha, he_ref[0], preferred_element_type=f32)   # (TN, Hp)
    ctx = jnp.where(ctx > 0, ctx, jnp.exp(jnp.minimum(ctx, 0.0)) - 1.0)

    # --- split-K accumulation of the two (·,3H)->(·,H) Linears ---
    ctx_acc[...] += jnp.dot(ctx.astype(bf16), WaT_ref[0],
                            preferred_element_type=f32)
    node_acc[...] += jnp.dot(nfeat_ref[0], WnT_ref[0],
                             preferred_element_type=f32)

    # --- final channel: add biases, GRUCell(context, node), ReLU ---
    @pl.when(c == nc - 1)
    def _():
        context = ctx_acc[...] + ba_ref[...]
        node = node_acc[...] + bn_ref[...]
        xc = context.astype(bf16)
        hc = node.astype(bf16)
        gi = jnp.dot(xc, WihT_ref[...], preferred_element_type=f32) + bih_ref[...]
        gh = jnp.dot(hc, WhhT_ref[...], preferred_element_type=f32) + bhh_ref[...]
        Nfp = out_ref.shape[1]                 # static, 128-aligned gate slices
        r = jax.nn.sigmoid(gi[:, :Nfp] + gh[:, :Nfp])
        z = jax.nn.sigmoid(gi[:, Nfp:2 * Nfp] + gh[:, Nfp:2 * Nfp])
        n = jnp.tanh(gi[:, 2 * Nfp:] + r * gh[:, 2 * Nfp:])
        h_new = (1.0 - z) * n + z * node
        out_ref[...] = jnp.maximum(h_new, 0.0)                      # F.relu


def prepare_params(p):
    """One-time weight prep: transpose, gate/K-block split, 128-pad, bf16."""
    We, be = p["We"], p["be"]            # (3,H,Fe), (3,1,H)
    Wa, ba = p["Wa"], p["ba"]            # (H,3H),  (1,H)
    Wn, bn = p["Wn"], p["bn"]
    Wih, Whh = p["Wih"], p["Whh"]        # (3Nf,H), (3Nf,Nf)
    bih, bhh = p["bih"], p["bhh"]        # (1,3Nf)
    H, Fe = We.shape[1], We.shape[2]
    Nf = Whh.shape[1]
    Hp, Fep, Nfp = _round_up(H, LANE), _round_up(Fe, LANE), _round_up(Nf, LANE)

    def pad2(x, r, c):
        return jnp.pad(x, ((0, r - x.shape[0]), (0, c - x.shape[1])))

    bf16, f32 = jnp.bfloat16, jnp.float32
    WeT = jnp.stack([pad2(We[i].T, Fep, Hp) for i in range(3)]).astype(bf16)
    beP = jnp.stack([pad2(be[i], 1, Hp) for i in range(3)]).astype(f32)
    WaT = jnp.stack([pad2(Wa[:, i * H:(i + 1) * H].T, Hp, Hp)
                     for i in range(3)]).astype(bf16)
    WnT = jnp.stack([pad2(Wn[:, i * H:(i + 1) * H].T, Hp, Hp)
                     for i in range(3)]).astype(bf16)
    baP = pad2(ba, 1, Hp).astype(f32)
    bnP = pad2(bn, 1, Hp).astype(f32)
    # GRU gate weights: transpose, pad each gate's Nf output columns to Nfp,
    # then concatenate on the lane axis -> one wide lane-dense matmul per side.
    WihT = jnp.concatenate([pad2(Wih[g * Nf:(g + 1) * Nf, :].T, Hp, Nfp)
                            for g in range(3)], axis=1).astype(bf16)
    WhhT = jnp.concatenate([pad2(Whh[g * Nf:(g + 1) * Nf, :].T, Nfp, Nfp)
                            for g in range(3)], axis=1).astype(bf16)
    bihP = jnp.concatenate([pad2(bih[:, g * Nf:(g + 1) * Nf], 1, Nfp)
                            for g in range(3)], axis=1).astype(f32)
    bhhP = jnp.concatenate([pad2(bhh[:, g * Nf:(g + 1) * Nf], 1, Nfp)
                            for g in range(3)], axis=1).astype(f32)
    return dict(WeT=WeT, be=beP, WaT=WaT, ba=baP, WnT=WnT, bn=bnP,
                WihT=WihT, WhhT=WhhT, bih=bihP, bhh=bhhP,
                H=H, Fe=Fe, Nf=Nf, Hp=Hp, Fep=Fep, Nfp=Nfp)


def attentive_gru1(A, edge_logits, edge_feats, node_feats, prep):
    """A: (N,E) incidence; edge_logits: (3,E,1); edge_feats: (3,E,Fe);
    node_feats: (3,N,H); prep: output of prepare_params."""
    N, E = A.shape
    H, Fe, Nf = prep["H"], prep["Fe"], prep["Nf"]
    Hp, Fep, Nfp = prep["Hp"], prep["Fep"], prep["Nfp"]

    Ep0 = _round_up(E, LANE)
    TE = min(512, Ep0)                   # edge tile for the transform kernel
    Ep = _round_up(E, TE)
    N8 = _round_up(N, SUB)
    TN = min(256, N8)                    # >=256-row node tiles on big graphs
    Np = _round_up(N, TN)

    bf16, f32 = jnp.bfloat16, jnp.float32
    A_p = jnp.pad(A.astype(bf16), ((0, Np - N), (0, Ep - E)))
    logit_p = jnp.pad(jnp.transpose(edge_logits, (0, 2, 1)).astype(f32),
                      ((0, 0), (0, 0), (0, Ep - E)))
    efeat_p = jnp.pad(edge_feats.astype(bf16),
                      ((0, 0), (0, Ep - E), (0, Fep - Fe)))
    nfeat_p = jnp.pad(node_feats.astype(bf16),
                      ((0, 0), (0, Np - N), (0, Hp - H)))

    # ---- kernel 1: per-channel edge transform (computed once per channel) ----
    he = pl.pallas_call(
        edge_transform_kernel,
        out_shape=jax.ShapeDtypeStruct((3, Ep, Hp), bf16),
        grid_spec=pltpu.PrefetchScalarGridSpec(
            num_scalar_prefetch=0,
            grid=(3, Ep // TE),
            in_specs=[pl.BlockSpec((1, TE, Fep), lambda c, e: (c, e, 0)),
                      pl.BlockSpec((1, Fep, Hp), lambda c, e: (c, 0, 0)),
                      pl.BlockSpec((1, 1, Hp), lambda c, e: (c, 0, 0))],
            out_specs=pl.BlockSpec((1, TE, Hp), lambda c, e: (c, e, 0))),
        compiler_params=pltpu.CompilerParams(
            dimension_semantics=("parallel", "parallel")),
    )(efeat_p, prep["WeT"], prep["be"])

    # ---- kernel 2: softmax aggregation + split-K Linears + GRU + ReLU ----
    grid = (Np // TN, 3)
    in_specs = [
        pl.BlockSpec((TN, Ep), lambda i, c: (i, 0)),          # A
        pl.BlockSpec((1, 1, Ep), lambda i, c: (c, 0, 0)),     # edge logits
        pl.BlockSpec((1, Ep, Hp), lambda i, c: (c, 0, 0)),    # h_e (transformed)
        pl.BlockSpec((1, TN, Hp), lambda i, c: (c, i, 0)),    # node feats
        pl.BlockSpec((1, Hp, Hp), lambda i, c: (c, 0, 0)),    # WaT K-block
        pl.BlockSpec((1, Hp), lambda i, c: (0, 0)),           # ba
        pl.BlockSpec((1, Hp, Hp), lambda i, c: (c, 0, 0)),    # WnT K-block
        pl.BlockSpec((1, Hp), lambda i, c: (0, 0)),           # bn
        pl.BlockSpec((Hp, 3 * Nfp), lambda i, c: (0, 0)),     # WihT (fused gates)
        pl.BlockSpec((Nfp, 3 * Nfp), lambda i, c: (0, 0)),    # WhhT (fused gates)
        pl.BlockSpec((1, 3 * Nfp), lambda i, c: (0, 0)),      # bih
        pl.BlockSpec((1, 3 * Nfp), lambda i, c: (0, 0)),      # bhh
    ]
    out_spec = pl.BlockSpec((TN, Nfp), lambda i, c: (i, 0))

    # Size scoped VMEM to the actual (double-buffered) working set; floor at
    # 32 MiB, cap at 64 MiB for v7x headroom.
    est = 2 * (TN * Ep * 2 + Ep * 4 + Ep * Hp * 2 + TN * Hp * 2
               + 2 * Hp * Hp * 2 + 2 * Hp * 4
               + Hp * 3 * Nfp * 2 + Nfp * 3 * Nfp * 2 + 2 * 3 * Nfp * 4
               + TN * Nfp * 4) + 2 * TN * Hp * 4
    vmem_limit = int(min(max(2 * est, 32 * 1024 * 1024), 64 * 1024 * 1024))

    out = pl.pallas_call(
        attentive_gru1_kernel,
        out_shape=jax.ShapeDtypeStruct((Np, Nfp), jnp.float32),
        grid_spec=pltpu.PrefetchScalarGridSpec(
            num_scalar_prefetch=0,
            grid=grid,
            in_specs=in_specs,
            out_specs=out_spec,
            scratch_shapes=[pltpu.VMEM((TN, Hp), jnp.float32),
                            pltpu.VMEM((TN, Hp), jnp.float32)]),
        compiler_params=pltpu.CompilerParams(
            dimension_semantics=("parallel", "arbitrary"),
            vmem_limit_bytes=vmem_limit),
    )(A_p, logit_p, he, nfeat_p,
      prep["WaT"], prep["ba"], prep["WnT"], prep["bn"],
      prep["WihT"], prep["WhhT"], prep["bih"], prep["bhh"])
    return out[:N, :Nf]


def init_params(key, node_feat_size, edge_feat_size, edge_hidden_size):
    """Deterministic PyTorch-style uniform init; weights kept in (out, in)."""
    H, Fe, Nf = edge_hidden_size, edge_feat_size, node_feat_size
    ks = jax.random.split(key, 8)

    def lin(k, out_d, in_d):
        kw, kb = jax.random.split(k)
        bound = 1.0 / (in_d ** 0.5)
        W = jax.random.uniform(kw, (out_d, in_d), jnp.float32, -bound, bound)
        b = jax.random.uniform(kb, (1, out_d), jnp.float32, -bound, bound)
        return W, b

    W1, b1 = lin(ks[0], H, Fe)
    W2, b2 = lin(ks[1], H, Fe)
    W3, b3 = lin(ks[2], H, Fe)
    Wa, ba = lin(ks[3], H, 3 * H)
    Wn, bn = lin(ks[4], H, 3 * H)
    gb = 1.0 / (Nf ** 0.5)
    Wih = jax.random.uniform(ks[5], (3 * Nf, H), jnp.float32, -gb, gb)
    Whh = jax.random.uniform(ks[6], (3 * Nf, Nf), jnp.float32, -gb, gb)
    kb1, kb2 = jax.random.split(ks[7])
    bih = jax.random.uniform(kb1, (1, 3 * Nf), jnp.float32, -gb, gb)
    bhh = jax.random.uniform(kb2, (1, 3 * Nf), jnp.float32, -gb, gb)
    return dict(We=jnp.stack([W1, W2, W3]), be=jnp.stack([b1, b2, b3]),
                Wa=Wa, ba=ba, Wn=Wn, bn=bn,
                Wih=Wih, Whh=Whh, bih=bih, bhh=bhh)


def reference(A, edge_logits, edge_feats, node_feats, p):
    """Pure-JAX f32 reference mirroring the PyTorch/DGL semantics."""
    N = A.shape[0]
    dst = jnp.argmax(A, axis=0)
    contexts = []
    for i in range(3):
        lg = edge_logits[i][:, 0]
        m = jax.ops.segment_max(lg, dst, num_segments=N)
        ex = jnp.exp(lg - m[dst])
        s = jax.ops.segment_sum(ex, dst, num_segments=N)
        alpha = (ex / s[dst])[:, None]
        h_e = edge_feats[i] @ p["We"][i].T + p["be"][i]
        c = jax.ops.segment_sum(alpha * h_e, dst, num_segments=N)
        contexts.append(jnp.where(c > 0, c, jnp.exp(c) - 1.0))
    context = jnp.concatenate(contexts, axis=1) @ p["Wa"].T + p["ba"]
    node = jnp.concatenate([node_feats[0], node_feats[1], node_feats[2]], axis=1)
    node = node @ p["Wn"].T + p["bn"]
    Nf = p["Whh"].shape[1]
    gi = context @ p["Wih"].T + p["bih"]
    gh = node @ p["Whh"].T + p["bhh"]
    r = jax.nn.sigmoid(gi[:, :Nf] + gh[:, :Nf])
    z = jax.nn.sigmoid(gi[:, Nf:2 * Nf] + gh[:, Nf:2 * Nf])
    n = jnp.tanh(gi[:, 2 * Nf:] + r * gh[:, 2 * Nf:])
    return jnp.maximum((1.0 - z) * n + z * node, 0.0)


if __name__ == "__main__":
    # 8 nodes, 16 edges, edge_feat_size=16,
    # edge_hidden_size = node_feat_size = 32 (required by the module's GRU wiring).
    N, E, Fe, H = 8, 16, 16, 32
    Nf = H

    key = jax.random.PRNGKey(0)
    k_log, k_ef, k_nf, k_par = jax.random.split(key, 4)

    # Graph: edge e points to node (e % N) -> every node has 2 incoming edges.
    dst = jnp.arange(E, dtype=jnp.int32) % N
    A = (dst[None, :] == jnp.arange(N, dtype=jnp.int32)[:, None]).astype(jnp.float32)

    edge_logits = jax.random.normal(k_log, (3, E, 1), jnp.float32)
    edge_feats = jax.random.normal(k_ef, (3, E, Fe), jnp.float32)
    node_feats = jax.random.normal(k_nf, (3, N, H), jnp.float32)
    params = init_params(k_par, Nf, Fe, H)
    prep = prepare_params(params)           # one-time weight prep (hoisted)

    out = attentive_gru1(A, edge_logits, edge_feats, node_feats, prep)
    out = jax.block_until_ready(out)

    ref = reference(A, edge_logits, edge_feats, node_feats, params)
    assert out.shape == (N, Nf)
    # bf16 MXU operands (f32 accumulation) -> compare with a bf16-aware tolerance.
    err = float(jnp.max(jnp.abs(out - ref)))
    assert err < 5e-2, f"mismatch vs pure-JAX reference (max abs err {err})"
    print("KERNEL_OK")
</pallas_src>

<mosaic_0001>
module attributes {stable_mosaic.version = 11 : i64} {
  func.func @edge_transform_kernel(%arg0: i32, %arg1: i32, %arg2: memref<1x128x128xbf16, #tpu.memory_space<vmem>>, %arg3: memref<1x128x128xbf16, #tpu.memory_space<vmem>>, %arg4: memref<1x1x128xf32, #tpu.memory_space<vmem>>, %arg5: memref<1x128x128xbf16, #tpu.memory_space<vmem>>) attributes {dimension_semantics = [#tpu.dimension_semantics<parallel>, #tpu.dimension_semantics<parallel>], iteration_bounds = array<i64: 3, 1>, scalar_prefetch = 0 : i64, scratch_operands = 0 : i64, tpu.core_type = #tpu.core_type<tc>, window_params = [{transform_indices = @transform_0, window_bounds = array<i64: 1, 128, 128>}, {transform_indices = @transform_1, window_bounds = array<i64: 1, 128, 128>}, {transform_indices = @transform_2, window_bounds = array<i64: 1, 1, 128>}, {transform_indices = @transform_3, window_bounds = array<i64: 1, 128, 128>}]} {
    %c0 = arith.constant 0 : index
    %c0_0 = arith.constant 0 : index
    %c0_1 = arith.constant 0 : index
    %0 = vector.load %arg2[%c0, %c0_0, %c0_1] : memref<1x128x128xbf16, #tpu.memory_space<vmem>>, vector<1x128x128xbf16>
    %1 = vector.shape_cast %0 : vector<1x128x128xbf16> to vector<128x128xbf16>
    %c0_2 = arith.constant 0 : index
    %c0_3 = arith.constant 0 : index
    %c0_4 = arith.constant 0 : index
    %2 = vector.load %arg3[%c0_2, %c0_3, %c0_4] : memref<1x128x128xbf16, #tpu.memory_space<vmem>>, vector<1x128x128xbf16>
    %3 = vector.shape_cast %2 : vector<1x128x128xbf16> to vector<128x128xbf16>
    %cst = arith.constant dense<0.000000e+00> : vector<128x128xf32>
    %4 = tpu.matmul %1, %3, %cst {dimension_numbers = #tpu.dot_dimension_numbers<[1], [0], [0], [1], [0, 0, 1, 1], [], []>} : vector<128x128xbf16>, vector<128x128xbf16>, vector<128x128xf32> -> vector<128x128xf32>
    %c0_5 = arith.constant 0 : index
    %c0_6 = arith.constant 0 : index
    %c0_7 = arith.constant 0 : index
    %5 = vector.load %arg4[%c0_5, %c0_6, %c0_7] : memref<1x1x128xf32, #tpu.memory_space<vmem>>, vector<1x1x128xf32>
    %6 = vector.shape_cast %5 : vector<1x1x128xf32> to vector<1x128xf32>
    %7 = vector.broadcast %6 : vector<1x128xf32> to vector<128x128xf32>
    %8 = arith.addf %4, %7 : vector<128x128xf32>
    %9 = arith.truncf %8 : vector<128x128xf32> to vector<128x128xbf16>
    %c0_8 = arith.constant 0 : index
    %c0_9 = arith.constant 0 : index
    %c0_10 = arith.constant 0 : index
    %10 = vector.load %arg5[%c0_8, %c0_9, %c0_10] : memref<1x128x128xbf16, #tpu.memory_space<vmem>>, vector<1x128x128xbf16>
    %11 = vector.shape_cast %10 : vector<1x128x128xbf16> to vector<128x128xbf16>
    %12 = vector.shape_cast %9 : vector<128x128xbf16> to vector<1x128x128xbf16>
    tpu.vector_store %arg5[%c0_8, %c0_9, %c0_10], %12 {strides = array<i32>} : memref<1x128x128xbf16, #tpu.memory_space<vmem>>, vector<1x128x128xbf16>,
    return
  }
  func.func @transform_0(%arg0: i32, %arg1: i32) -> (i32, i32, i32) {
    %c0_i32 = arith.constant 0 : i32
    %c0_i32_0 = arith.constant 0 : i32
    return %arg0, %arg1, %c0_i32 : i32, i32, i32
  }
  func.func @transform_1(%arg0: i32, %arg1: i32) -> (i32, i32, i32) {
    %c0_i32 = arith.constant 0 : i32
    %c0_i32_0 = arith.constant 0 : i32
    %c0_i32_1 = arith.constant 0 : i32
    return %arg0, %c0_i32, %c0_i32_0 : i32, i32, i32
  }
  func.func @transform_2(%arg0: i32, %arg1: i32) -> (i32, i32, i32) {
    %c0_i32 = arith.constant 0 : i32
    %c0_i32_0 = arith.constant 0 : i32
    %c0_i32_1 = arith.constant 0 : i32
    return %arg0, %c0_i32, %c0_i32_0 : i32, i32, i32
  }
  func.func @transform_3(%arg0: i32, %arg1: i32) -> (i32, i32, i32) {
    %c0_i32 = arith.constant 0 : i32
    %c0_i32_0 = arith.constant 0 : i32
    return %arg0, %arg1, %c0_i32 : i32, i32, i32
  }
}

</mosaic_0001>

<llo_original>
// kernel: tpu_custom_call.1
$region0: #{tpu_custom_call.1}
  #allocation0 [shape = 'u32[]', space=smem, size = 0x4, offset = 0x4, fixed_abs, tag = 'smem constant byte address 0x4 - core index']
  #allocation1 [shape = 'u32[144,128]{1,0:T(1,128)}', space=vmem, size = 0x12000, scoped, tag = 'internal scratch']
  %s0 = inlined_call_operand.hbm [shape: bf16[3,128,128], index: 0, kind: input, shape index: {}]
  %s1 = inlined_call_operand.hbm [shape: bf16[3,128,128], index: 1, kind: input, shape index: {}]
  %s2 = inlined_call_operand.vmem [shape: f32[3,1,128], index: 2, kind: input, shape index: {}]
  %s3 = inlined_call_operand.hbm [shape: bf16[3,128,128], index: 3, kind: output, shape index: {}]
  %s4 = sld [smem:[#allocation0]]
  $region53: #{tpu_custom_call.1} parent=0
    _
  %s6 = ssub.s32 1, %s4
  %s7 = scalar_select 0, %s6, %s4
  $region1: #{tpu_custom_call.1} parent=0
    #allocation2 [shape = 'u8[65536]{0}', space=vmem, size = 0x10000, scoped, tag = 'input window, operand 0']
    #allocation3 [shape = 's32[2]{0}', space=sflag, size = 0x8, scoped, tag = 'scoped memory for tpu_custom_call.1']
    #allocation4 [shape = 's32[2]{0}', space=sflag, size = 0x8, scoped, tag = 'scoped memory for tpu_custom_call.1']
    #allocation5 [shape = 'u8[65536]{0}', space=vmem, size = 0x10000, scoped, tag = 'input window, operand 1']
    #allocation6 [shape = 's32[2]{0}', space=sflag, size = 0x8, scoped, tag = 'scoped memory for tpu_custom_call.1']
    #allocation7 [shape = 'u8[65536]{0}', space=vmem, size = 0x10000, scoped, tag = 'output window, operand 0']
    %8 = vsyncpa [#allocation3], 0
    %s9 = scalar_lea.sflag [#allocation3], 1
    %10 = vsyncpa %s9, 0
    %11 = vsyncpa [#allocation6], 0
    %s12 = scalar_lea.sflag [#allocation6], 1
    %13 = vsyncpa %s12, 0
    %14 = vsyncpa [#allocation4], 0
    %s15 = scalar_lea.sflag [#allocation4], 1
    %16 = vsyncpa %s15, 0
    loop: start=0, step=1, limit=5
    $region2: #{tpu_custom_call.1} parent=1 // loop_pre_header
      _
    $region3: #{tpu_custom_call.1} parent=1 // loop_header
      %s18 = sphi 0, %s22
      %p19 = scmp.ge.s32.totalorder %s18, 5
      %s25 = sphi 0, %s37
      %s26 = sphi 0, %s33
      %s27 = sphi 0, %s25
      %s28 = sphi 0, %s26
      %s29 = sphi 0, %s27
      %s30 = sphi 0, %s28
      %s42 = sphi 0, %s44
      %s45 = sphi 0, %s42
      %s46 = sphi 0, %s45
      %s62 = sphi 0, %s46
      %s68 = sphi 0, %s70
      %s71 = sphi 0, %s68
      %s72 = sphi 0, %s71
      %s88 = sphi 0, %s72
      %s94 = sphi 0, %s96
      %s97 = sphi 0, %s94
      %s98 = sphi 0, %s97
      %s114 = sphi 0, %s98
      %s122 = sphi 0, %s124
      %s125 = sphi 0, %s122
      %s126 = sphi 0, %s125
      %s142 = sphi 0, %s126
    $region4: #{tpu_custom_call.1} parent=1 // loop_header_branch
      %21 = sbr.rel (%p19) target = $region8
    $region5: #{tpu_custom_call.1} parent=1 // loop_body
      %s23 = ssub.s32 %s18, 1
      %s24 = ssub.s32 %s18, 2
      %s31 = sadd.s32 1, %s26
      %p32 = scmp.ge.s32.totalorder %s31, 1
      %s33 = scalar_select %p32, 0, %s31
      %s34 = sadd.s32 1, %s25
      %s35 = scalar_select %p32, %s34, %s25
      %p36 = scmp.ge.s32.totalorder %s35, 3
      %s37 = scalar_select %p36, 0, %s35
      %s38 = ssub.s32 %s25, %s37
      %s39 = ssub.s32 %s26, %s33
      %s40 = sor.u32 %s38, %s39
      %p41 = scmp.eq.s32.totalorder %s40, 0
      %s43 = sadd.s32 %s42, 1
      %s44 = scalar_select %p41, %s42, %s43
      %p47 = pneg %p41
      %p48 = scmp.eq.s32.totalorder %s18, 2
      %p49 = por %p47, %p48
      %p50 = scmp.ne.s32.totalorder %s42, %s45
      %p51 = scmp.eq.s32.totalorder %s18, 0
      %p52 = por %p50, %p51
      %p53 = scmp.ne.s32.totalorder %s42, %s45
      %p54 = scmp.eq.s32.totalorder %s23, 2
      %p55 = por %p53, %p54
      %p56 = scmp.ne.s32.totalorder %s45, %s46
      %p57 = scmp.eq.s32.totalorder %s23, 0
      %p58 = por %p56, %p57
      %p59 = scmp.ne.s32.totalorder %s45, %s46
      %p60 = scmp.eq.s32.totalorder %s24, 2
      %p61 = por %p59, %p60
      %p63 = scmp.ne.s32.totalorder %s46, %s62
      %p64 = scmp.eq.s32.totalorder %s24, 0
      %p65 = por %p63, %p64
      %s66 = ssub.s32 %s25, %s37
      %p67 = scmp.eq.s32.totalorder %s66, 0
      %s69 = sadd.s32 %s68, 1
      %s70 = scalar_select %p67, %s68, %s69
      %p73 = pneg %p67
      %p74 = scmp.eq.s32.totalorder %s18, 2
      %p75 = por %p73, %p74
      %p76 = scmp.ne.s32.totalorder %s68, %s71
      %p77 = scmp.eq.s32.totalorder %s18, 0
      %p78 = por %p76, %p77
      %p79 = scmp.ne.s32.totalorder %s68, %s71
      %p80 = scmp.eq.s32.totalorder %s23, 2
      %p81 = por %p79, %p80
      %p82 = scmp.ne.s32.totalorder %s71, %s72
      %p83 = scmp.eq.s32.totalorder %s23, 0
      %p84 = por %p82, %p83
      %p85 = scmp.ne.s32.totalorder %s71, %s72
      %p86 = scmp.eq.s32.totalorder %s24, 2
      %p87 = por %p85, %p86
      %p89 = scmp.ne.s32.totalorder %s72, %s88
      %p90 = scmp.eq.s32.totalorder %s24, 0
      %p91 = por %p89, %p90
      %s92 = ssub.s32 %s25, %s37
      %p93 = scmp.eq.s32.totalorder %s92, 0
      %s95 = sadd.s32 %s94, 1
      %s96 = scalar_select %p93, %s94, %s95
      %p99 = pneg %p93
      %p100 = scmp.eq.s32.totalorder %s18, 2
      %p101 = por %p99, %p100
      %p102 = scmp.ne.s32.totalorder %s94, %s97
      %p103 = scmp.eq.s32.totalorder %s18, 0
      %p104 = por %p102, %p103
      %p105 = scmp.ne.s32.totalorder %s94, %s97
      %p106 = scmp.eq.s32.totalorder %s23, 2
      %p107 = por %p105, %p106
      %p108 = scmp.ne.s32.totalorder %s97, %s98
      %p109 = scmp.eq.s32.totalorder %s23, 0
      %p110 = por %p108, %p109
      %p111 = scmp.ne.s32.totalorder %s97, %s98
      %p112 = scmp.eq.s32.totalorder %s24, 2
      %p113 = por %p111, %p112
      %p115 = scmp.ne.s32.totalorder %s98, %s114
      %p116 = scmp.eq.s32.totalorder %s24, 0
      %p117 = por %p115, %p116
      %s118 = ssub.s32 %s25, %s37
      %s119 = ssub.s32 %s26, %s33
      %s120 = sor.u32 %s118, %s119
      %p121 = scmp.eq.s32.totalorder %s120, 0
      %s123 = sadd.s32 %s122, 1
      %s124 = scalar_select %p121, %s122, %s123
      %p127 = pneg %p121
      %p128 = scmp.eq.s32.totalorder %s18, 2
      %p129 = por %p127, %p128
      %p130 = scmp.ne.s32.totalorder %s122, %s125
      %p131 = scmp.eq.s32.totalorder %s18, 0
      %p132 = por %p130, %p131
      %p133 = scmp.ne.s32.totalorder %s122, %s125
      %p134 = scmp.eq.s32.totalorder %s23, 2
      %p135 = por %p133, %p134
      %p136 = scmp.ne.s32.totalorder %s125, %s126
      %p137 = scmp.eq.s32.totalorder %s23, 0
      %p138 = por %p136, %p137
      %p139 = scmp.ne.s32.totalorder %s125, %s126
      %p140 = scmp.eq.s32.totalorder %s24, 2
      %p141 = por %p139, %p140
      %p143 = scmp.ne.s32.totalorder %s126, %s142
      %p144 = scmp.eq.s32.totalorder %s24, 0
      %p145 = por %p143, %p144
      %p146 = scmp.le.s32.totalorder 1, %s18
      %p147 = scmp.lt.s32.totalorder %s18, 4
      %p148 = pnand %p146, %p147
      %p149 = pneg %p148
      // Predicated region
      $region9: #{tpu_custom_call.1} parent=5 // pred_check
        _
      $region10: #{tpu_custom_call.1} parent=5 // pred_check_branch
        %151 = sbr.rel (%p148) target = $region12
      $region11: #{tpu_custom_call.1} parent=5 // pred_region
        %s152 = ssub.s32 %s18, 1
      $region12: #{tpu_custom_call.1} parent=5 // pred_fallthru
        _
      %p153 = scmp.lt.s32.totalorder %s18, 3
      // Predicated region
      $region13: #{tpu_custom_call.1} parent=5 // pred_check
        %p154 = pneg %p153
      $region14: #{tpu_custom_call.1} parent=5 // pred_check_branch
        %156 = sbr.rel (%p154) target = $region16
      $region15: #{tpu_custom_call.1} parent=5 // pred_region
        // Predicated region
        $region17: #{tpu_custom_call.1} parent=15 // pred_check
          %p157 = pneg %p52
        $region18: #{tpu_custom_call.1} parent=15 // pred_check_branch
          %159 = sbr.rel (%p157) target = $region20
        $region19: #{tpu_custom_call.1} parent=15 // pred_region
          %s160 = sand.u32 %s42, 1
          %s161 = scalar_lea.sflag [#allocation3], %s160
          %s162 = sand.u32 %s42, 1
          %s163 = smul.addr %s162, 64
          %s164 = scalar_lea.vmem [#allocation2], %s163
          %s165 = smul.u32 16, %s26
          %s167 = ssub.s32 1024, 1024
          %168 = vsyncadd %s161, %s167
          %s169 = smul.addr %s25, 16
          %s170 = sadd.s32 %s165, %s169
          %s171 = smul.addr %s170, 64
          %s172 = scalar_lea.hbm %s0, %s171
          %s173 = sshll.u32 %s164, 4
          %s174 = int_to_ptr.vmem [resolvable:$true] %s173
          %179 = dma.hbm_to_vmem [thread:$0]  %s172, 1024, %s174, %s161, 64, 64, 4
        $region20: #{tpu_custom_call.1} parent=15 // pred_fallthru
          _
        // Predicated region
        $region21: #{tpu_custom_call.1} parent=15 // pred_check
          %p180 = pneg %p78
        $region22: #{tpu_custom_call.1} parent=15 // pred_check_branch
          %182 = sbr.rel (%p180) target = $region24
        $region23: #{tpu_custom_call.1} parent=15 // pred_region
          %s183 = sand.u32 %s68, 1
          %s184 = scalar_lea.sflag [#allocation6], %s183
          %s185 = sand.u32 %s68, 1
          %s186 = smul.addr %s185, 64
          %s187 = scalar_lea.vmem [#allocation5], %s186
          %s189 = ssub.s32 1024, 1024
          %190 = vsyncadd %s184, %s189
          %s191 = smul.addr %s25, 16
          %s192 = smul.addr %s191, 64
          %s193 = scalar_lea.hbm %s1, %s192
          %s194 = sshll.u32 %s187, 4
          %s195 = int_to_ptr.vmem [resolvable:$true] %s194
          %200 = dma.hbm_to_vmem [thread:$0]  %s193, 1024, %s195, %s184, 64, 64, 4
        $region24: #{tpu_custom_call.1} parent=15 // pred_fallthru
          _
        // Predicated region
        $region25: #{tpu_custom_call.1} parent=15 // pred_check
          %p201 = pneg %p104
        $region26: #{tpu_custom_call.1} parent=15 // pred_check_branch
          %203 = sbr.rel (%p201) target = $region28
        $region27: #{tpu_custom_call.1} parent=15 // pred_region
          %p204 = scmp.lt.s32.totalorder %s25, 2
          %s205 = scalar_select %p204, %s25, 2
          %s206 = scalar_lea.vmem %s2, %s205
        $region28: #{tpu_custom_call.1} parent=15 // pred_fallthru
          _
      $region16: #{tpu_custom_call.1} parent=5 // pred_fallthru
        _
      %p207 = scmp.le.s32.totalorder 1, %s18
      %p208 = scmp.lt.s32.totalorder %s18, 4
      %p209 = pnand %p207, %p208
      %p210 = pneg %p209
      // Predicated region
      $region29: #{tpu_custom_call.1} parent=5 // pred_check
        _
      $region30: #{tpu_custom_call.1} parent=5 // pred_check_branch
        %212 = sbr.rel (%p209) target = $region32
      $region31: #{tpu_custom_call.1} parent=5 // pred_region
        %s213 = ssub.s32 %s18, 1
        %s214 = sand.u32 %s45, 1
        %s215 = scalar_lea.sflag [#allocation3], %s214
        %s216 = sand.u32 %s45, 1
        %s217 = smul.addr %s216, 64
        %s218 = scalar_lea.vmem [#allocation2], %s217
        // Predicated region
        $region33: #{tpu_custom_call.1} parent=31 // pred_check
          %p219 = pneg %p58
        $region34: #{tpu_custom_call.1} parent=31 // pred_check_branch
          %221 = sbr.rel (%p219) target = $region36
        $region35: #{tpu_custom_call.1} parent=31 // pred_region
          %222 = dma.done %s215, 1024
        $region36: #{tpu_custom_call.1} parent=31 // pred_fallthru
          _
        %s223 = sand.u32 %s71, 1
        %s224 = scalar_lea.sflag [#allocation6], %s223
        %s225 = sand.u32 %s71, 1
        %s226 = smul.addr %s225, 64
        %s227 = scalar_lea.vmem [#allocation5], %s226
        // Predicated region
        $region37: #{tpu_custom_call.1} parent=31 // pred_check
          %p228 = pneg %p84
        $region38: #{tpu_custom_call.1} parent=31 // pred_check_branch
          %230 = sbr.rel (%p228) target = $region40
        $region39: #{tpu_custom_call.1} parent=31 // pred_region
          %231 = dma.done %s224, 1024
        $region40: #{tpu_custom_call.1} parent=31 // pred_fallthru
          _
        %s232 = sand.u32 %s45, 1
        %s233 = scalar_lea.sflag [#allocation3], %s232
        %s234 = sand.u32 %s45, 1
        %s235 = smul.addr %s234, 64
        %s236 = scalar_lea.vmem [#allocation2], %s235
        %p237 = pneg %p58
        %p238 = pneg %p55
        %s239 = sand.u32 %s71, 1
        %s240 = scalar_lea.sflag [#allocation6], %s239
        %s241 = sand.u32 %s71, 1
        %s242 = smul.addr %s241, 64
        %s243 = scalar_lea.vmem [#allocation5], %s242
        %p244 = pneg %p84
        %p245 = pneg %p81
        %p246 = scmp.lt.s32.totalorder %s27, 2
        %s247 = scalar_select %p246, %s27, 2
        %s248 = scalar_lea.vmem %s2, %s247
        %p249 = pneg %p110
        %p250 = pneg %p107
        %p251 = pneg %p138
        %p252 = pneg %p135
        %s253 = sand.u32 %s125, 1
        %s254 = scalar_lea.sflag [#allocation4], %s253
        %s255 = sand.u32 %s125, 1
        %s256 = smul.addr %s255, 64
        %s257 = scalar_lea.vmem [#allocation7], %s256
        %s258 = smul.u32 16, %s28
        %p259 = scmp.lt.s32.totalorder %s27, 2
        %s260 = scalar_select %p259, %s27, 2
        %s261 = scalar_lea.vmem %s2, %s260
        %s262 = smul.u32 16, %s28
        %v264 = vld [vmem:[%s218] sm:$0xf]
        %v265 = vld [vmem:[%s218 + $0x4] sm:$0xf]
        %v266 = vld [vmem:[%s218 + $0x8] sm:$0xf]
        %v267 = vld [vmem:[%s218 + $0xc] sm:$0xf]
        %v268 = vld [vmem:[%s218 + $0x10] sm:$0xf]
        %v269 = vld [vmem:[%s218 + $0x14] sm:$0xf]
        %v270 = vld [vmem:[%s218 + $0x18] sm:$0xf]
        %v271 = vld [vmem:[%s218 + $0x1c] sm:$0xf]
        %v272 = vld [vmem:[%s218 + $0x20] sm:$0xf]
        %v273 = vld [vmem:[%s218 + $0x24] sm:$0xf]
        %v274 = vld [vmem:[%s218 + $0x28] sm:$0xf]
        %v275 = vld [vmem:[%s218 + $0x2c] sm:$0xf]
        %v276 = vld [vmem:[%s218 + $0x30] sm:$0xf]
        %v277 = vld [vmem:[%s218 + $0x34] sm:$0xf]
        %v278 = vld [vmem:[%s218 + $0x38] sm:$0xf]
        %v279 = vld [vmem:[%s218 + $0x3c] sm:$0xf]
        %v280 = vld [vmem:[%s227] sm:$0xf]
        %v281 = vld [vmem:[%s227 + $0x4] sm:$0xf]
        %v282 = vld [vmem:[%s227 + $0x8] sm:$0xf]
        %v283 = vld [vmem:[%s227 + $0xc] sm:$0xf]
        %v284 = vld [vmem:[%s227 + $0x10] sm:$0xf]
        %v285 = vld [vmem:[%s227 + $0x14] sm:$0xf]
        %v286 = vld [vmem:[%s227 + $0x18] sm:$0xf]
        %v287 = vld [vmem:[%s227 + $0x1c] sm:$0xf]
        %v288 = vld [vmem:[%s227 + $0x20] sm:$0xf]
        %v289 = vld [vmem:[%s227 + $0x24] sm:$0xf]
        %v290 = vld [vmem:[%s227 + $0x28] sm:$0xf]
        %v291 = vld [vmem:[%s227 + $0x2c] sm:$0xf]
        %v292 = vld [vmem:[%s227 + $0x30] sm:$0xf]
        %v293 = vld [vmem:[%s227 + $0x34] sm:$0xf]
        %v294 = vld [vmem:[%s227 + $0x38] sm:$0xf]
        %v295 = vld [vmem:[%s227 + $0x3c] sm:$0xf]
        %v296 = vld [vmem:[%s261] sm:$0x1]
        %v298 = vlaneseq
        %v299 = vshrl.u32 %v298, 7
        %v300 = vsub.s32 0, %v299
        %v301 = vrot.slane %v296, %v300
        %v319 = vunpack.c.l.b16 %v264
        %v320 = vunpack.c.l.b16 %v265
        %v321 = vunpack.c.l.b16 %v266
        %v322 = vunpack.c.l.b16 %v267
        %v323 = vunpack.c.l.b16 %v268
        %v324 = vunpack.c.l.b16 %v269
        %v325 = vunpack.c.l.b16 %v270
        %v326 = vunpack.c.l.b16 %v271
        %v327 = vunpack.c.l.b16 %v272
        %v328 = vunpack.c.l.b16 %v273
        %v329 = vunpack.c.l.b16 %v274
        %v330 = vunpack.c.l.b16 %v275
        %v331 = vunpack.c.l.b16 %v276
        %v332 = vunpack.c.l.b16 %v277
        %v333 = vunpack.c.l.b16 %v278
        %v334 = vunpack.c.l.b16 %v279
        %v335 = vpack.c.b16 %v320, %v319
        %v336 = vpack.c.b16 %v322, %v321
        %v337 = vpack.c.b16 %v324, %v323
        %v338 = vpack.c.b16 %v326, %v325
        %v339 = vpack.c.b16 %v328, %v327
        %v340 = vpack.c.b16 %v330, %v329
        %v341 = vpack.c.b16 %v332, %v331
        %v342 = vpack.c.b16 %v334, %v333
        %v367 = vunpack.c.l.b16 %v280
        %v368 = vunpack.c.l.b16 %v281
        %v369 = vunpack.c.l.b16 %v282
        %v370 = vunpack.c.l.b16 %v283
        %v371 = vunpack.c.l.b16 %v284
        %v372 = vunpack.c.l.b16 %v285
        %v373 = vunpack.c.l.b16 %v286
        %v374 = vunpack.c.l.b16 %v287
        %v375 = vunpack.c.l.b16 %v288
        %v376 = vunpack.c.l.b16 %v289
        %v377 = vunpack.c.l.b16 %v290
        %v378 = vunpack.c.l.b16 %v291
        %v379 = vunpack.c.l.b16 %v292
        %v380 = vunpack.c.l.b16 %v293
        %v381 = vunpack.c.l.b16 %v294
        %v382 = vunpack.c.l.b16 %v295
        %v383 = vpack.c.b16 %v368, %v367
        %v384 = vpack.c.b16 %v370, %v369
        %v385 = vpack.c.b16 %v372, %v371
        %v386 = vpack.c.b16 %v374, %v373
        %v387 = vpack.c.b16 %v376, %v375
        %v388 = vpack.c.b16 %v378, %v377
        %v389 = vpack.c.b16 %v380, %v379
        %v390 = vpack.c.b16 %v382, %v381
        %399 = vmatprep.subr.bf16.mxu0 0
        %400 = vmatpush1.bf16.msra.mxu0 %v390
        %401 = vmatprep.subr.bf16.mxu0 0
        %402 = vmatpush1.bf16.msra.mxu0 %v389
        %403 = vmatprep.subr.bf16.mxu0 0
        %404 = vmatpush1.bf16.msra.mxu0 %v388
        %405 = vmatprep.subr.bf16.mxu0 0
        %406 = vmatpush1.bf16.msra.mxu0 %v387
        %407 = vmatprep.subr.bf16.mxu0 0
        %408 = vmatpush1.bf16.msra.mxu0 %v386
        %409 = vmatprep.subr.bf16.mxu0 0
        %410 = vmatpush1.bf16.msra.mxu0 %v385
        %411 = vmatprep.subr.bf16.mxu0 0
        %412 = vmatpush1.bf16.msra.mxu0 %v384
        %413 = vmatprep.subr.bf16.mxu0 0
        %414 = vmatpush1.bf16.msra.mxu0 %v383
        %415 = vmatprep.subr.bf16.mxu0 0
        %416 = vmatpush2.bf16.msra.mxu0 0
        %417 = vmatprep.subr.bf16.mxu0 0
        %418 = vmatpush2.bf16.msra.mxu0 0
        %419 = vmatprep.subr.bf16.mxu0 0
        %420 = vmatpush2.bf16.msra.mxu0 0
        %421 = vmatprep.subr.bf16.mxu0 0
        %422 = vmatpush2.bf16.msra.mxu0 0
        %423 = vmatprep.subr.bf16.mxu0 0
        %424 = vmatpush2.bf16.msra.mxu0 0
        %425 = vmatprep.subr.bf16.mxu0 0
        %426 = vmatpush2.bf16.msra.mxu0 0
        %427 = vmatprep.subr.bf16.mxu0 0
        %428 = vmatpush2.bf16.msra.mxu0 0
        %429 = vmatprep.subr.bf16.mxu0 0
        %430 = vmatpush2.bf16.msra.mxu0 0
        %431 = vmatprep.mubr.bf16.mxu0 0
        %432 = vmatmul.mubr.bf16.gmra.mxu0 %v335
        %v433 = vpop.f32.mrf.mxu0
        %v434 = vadd.f32 %v301, %v433
        %v435 = vpop.f32.mrf.mxu0
        %v436 = vpop.f32.mrf.mxu0
        %v437 = vadd.f32 %v301, %v436
        %v438 = vpop.f32.mrf.mxu0
        %439 = vmatprep.mubr.bf16.mxu0 0
        %440 = vmatmul.mubr.bf16.gmra.mxu0 %v336
        %v441 = vpop.f32.mrf.mxu0
        %v442 = vadd.f32 %v301, %v441
        %v443 = vpop.f32.mrf.mxu0
        %v444 = vpop.f32.mrf.mxu0
        %v445 = vadd.f32 %v301, %v444
        %v446 = vpop.f32.mrf.mxu0
        %447 = vmatprep.mubr.bf16.mxu0 0
        %448 = vmatmul.mubr.bf16.gmra.mxu0 %v337
        %v449 = vpop.f32.mrf.mxu0
        %v450 = vadd.f32 %v301, %v449
        %v451 = vpop.f32.mrf.mxu0
        %v452 = vpop.f32.mrf.mxu0
        %v453 = vadd.f32 %v301, %v452
        %v454 = vpop.f32.mrf.mxu0
        %455 = vmatprep.mubr.bf16.mxu0 0
        %456 = vmatmul.mubr.bf16.gmra.mxu0 %v338
        %v457 = vpop.f32.mrf.mxu0
        %v458 = vadd.f32 %v301, %v457
        %v459 = vpop.f32.mrf.mxu0
        %v460 = vpop.f32.mrf.mxu0
        %v461 = vadd.f32 %v301, %v460
        %v462 = vpop.f32.mrf.mxu0
        %463 = vmatprep.mubr.bf16.mxu0 0
        %464 = vmatmul.mubr.bf16.gmra.mxu0 %v339
        %v465 = vpop.f32.mrf.mxu0
        %v466 = vadd.f32 %v301, %v465
        %v467 = vpop.f32.mrf.mxu0
        %v468 = vpop.f32.mrf.mxu0
        %v469 = vadd.f32 %v301, %v468
        %v470 = vpop.f32.mrf.mxu0
        %471 = vmatprep.mubr.bf16.mxu0 0
        %472 = vmatmul.mubr.bf16.gmra.mxu0 %v340
        %v473 = vpop.f32.mrf.mxu0
        %v474 = vadd.f32 %v301, %v473
        %v475 = vpop.f32.mrf.mxu0
        %v476 = vpop.f32.mrf.mxu0
        %v477 = vadd.f32 %v301, %v476
        %v478 = vpop.f32.mrf.mxu0
        %479 = vmatprep.mubr.bf16.mxu0 0
        %480 = vmatmul.mubr.bf16.gmra.mxu0 %v341
        %v481 = vpop.f32.mrf.mxu0
        %v482 = vadd.f32 %v301, %v481
        %v483 = vpop.f32.mrf.mxu0
        %v484 = vpop.f32.mrf.mxu0
        %v485 = vadd.f32 %v301, %v484
        %v486 = vpop.f32.mrf.mxu0
        %487 = vmatprep.mubr.bf16.mxu0 0
        %488 = vmatmul.mubr.bf16.gmra.mxu0 %v342
        %v489 = vpop.f32.mrf.mxu0
        %v490 = vadd.f32 %v301, %v489
        %v491 = vpop.f32.mrf.mxu0
        %v492 = vpop.f32.mrf.mxu0
        %v493 = vadd.f32 %v301, %v492
        %v494 = vpop.f32.mrf.mxu0
        %495 = vdwg.mxu0
        %v496 = vpack.c.bf16 %v437, %v434
        %v497 = vpack.c.bf16 %v445, %v442
        %v498 = vpack.c.bf16 %v453, %v450
        %v499 = vpack.c.bf16 %v461, %v458
        %v500 = vpack.c.bf16 %v469, %v466
        %v501 = vpack.c.bf16 %v477, %v474
        %v502 = vpack.c.bf16 %v485, %v482
        %v503 = vpack.c.bf16 %v493, %v490
        %v512 = vunpack.c.l.b16 %v496
        %v513 = vunpack.c.h.b16 %v496
        %v514 = vunpack.c.l.b16 %v497
        %v515 = vunpack.c.h.b16 %v497
        %v516 = vunpack.c.l.b16 %v498
        %v517 = vunpack.c.h.b16 %v498
        %v518 = vunpack.c.l.b16 %v499
        %v519 = vunpack.c.h.b16 %v499
        %v520 = vunpack.c.l.b16 %v500
        %v521 = vunpack.c.h.b16 %v500
        %v522 = vunpack.c.l.b16 %v501
        %v523 = vunpack.c.h.b16 %v501
        %v524 = vunpack.c.l.b16 %v502
        %v525 = vunpack.c.h.b16 %v502
        %v526 = vunpack.c.l.b16 %v503
        %v527 = vunpack.c.h.b16 %v503
        %v528 = vpack.c.b16 %v512, %v512
        %v529 = vpack.c.b16 %v513, %v513
        %v530 = vpack.c.b16 %v514, %v514
        %v531 = vpack.c.b16 %v515, %v515
        %v532 = vpack.c.b16 %v516, %v516
        %v533 = vpack.c.b16 %v517, %v517
        %v534 = vpack.c.b16 %v518, %v518
        %v535 = vpack.c.b16 %v519, %v519
        %v536 = vpack.c.b16 %v520, %v520
        %v537 = vpack.c.b16 %v521, %v521
        %v538 = vpack.c.b16 %v522, %v522
        %v539 = vpack.c.b16 %v523, %v523
        %v540 = vpack.c.b16 %v524, %v524
        %v541 = vpack.c.b16 %v525, %v525
        %v542 = vpack.c.b16 %v526, %v526
        %v543 = vpack.c.b16 %v527, %v527
        %560 = vst [vmem:[%s257] sm:$0xf] %v528
        %561 = vst [vmem:[%s257 + $0x4] sm:$0xf] %v529
        %562 = vst [vmem:[%s257 + $0x8] sm:$0xf] %v530
        %563 = vst [vmem:[%s257 + $0xc] sm:$0xf] %v531
        %564 = vst [vmem:[%s257 + $0x10] sm:$0xf] %v532
        %565 = vst [vmem:[%s257 + $0x14] sm:$0xf] %v533
        %566 = vst [vmem:[%s257 + $0x18] sm:$0xf] %v534
        %567 = vst [vmem:[%s257 + $0x1c] sm:$0xf] %v535
        %568 = vst [vmem:[%s257 + $0x20] sm:$0xf] %v536
        %569 = vst [vmem:[%s257 + $0x24] sm:$0xf] %v537
        %570 = vst [vmem:[%s257 + $0x28] sm:$0xf] %v538
        %571 = vst [vmem:[%s257 + $0x2c] sm:$0xf] %v539
        %572 = vst [vmem:[%s257 + $0x30] sm:$0xf] %v540
        %573 = vst [vmem:[%s257 + $0x34] sm:$0xf] %v541
        %574 = vst [vmem:[%s257 + $0x38] sm:$0xf] %v542
        %575 = vst [vmem:[%s257 + $0x3c] sm:$0xf] %v543
        %s576 = sand.u32 %s125, 1
        %s577 = scalar_lea.sflag [#allocation4], %s576
        %s578 = sand.u32 %s125, 1
        %s579 = smul.addr %s578, 64
        %s580 = scalar_lea.vmem [#allocation7], %s579
        // Predicated region
        $region41: #{tpu_custom_call.1} parent=31 // pred_check
          %p581 = pneg %p135
        $region42: #{tpu_custom_call.1} parent=31 // pred_check_branch
          %583 = sbr.rel (%p581) target = $region44
        $region43: #{tpu_custom_call.1} parent=31 // pred_region
          %s584 = smul.u32 16, %s28
          %s586 = ssub.s32 1024, 1024
          %587 = vsyncadd %s577, %s586
          %s588 = smul.addr %s27, 16
          %s589 = sadd.s32 %s584, %s588
          %s590 = smul.addr %s589, 64
          %s591 = scalar_lea.hbm %s3, %s590
          %s592 = sshll.u32 %s580, 4
          %s593 = int_to_ptr.vmem [resolvable:$true] %s592
          %598 = dma.vmem_to_hbm [thread:$0]  %s593, 1024, %s591, %s577, 64, 64, 4
        $region44: #{tpu_custom_call.1} parent=31 // pred_fallthru
          _
      $region32: #{tpu_custom_call.1} parent=5 // pred_fallthru
        _
      %p599 = scmp.le.s32.totalorder 2, %s18
      // Predicated region
      $region45: #{tpu_custom_call.1} parent=5 // pred_check
        %p600 = pneg %p599
      $region46: #{tpu_custom_call.1} parent=5 // pred_check_branch
        %602 = sbr.rel (%p600) target = $region48
      $region47: #{tpu_custom_call.1} parent=5 // pred_region
        %s603 = ssub.s32 %s18, 2
        // Predicated region
        $region49: #{tpu_custom_call.1} parent=47 // pred_check
          %p604 = pneg %p141
        $region50: #{tpu_custom_call.1} parent=47 // pred_check_branch
          %606 = sbr.rel (%p604) target = $region52
        $region51: #{tpu_custom_call.1} parent=47 // pred_region
          %s607 = sand.u32 %s126, 1
          %s608 = scalar_lea.sflag [#allocation4], %s607
          %s609 = sand.u32 %s126, 1
          %s610 = smul.addr %s609, 64
          %s611 = scalar_lea.vmem [#allocation7], %s610
          %612 = dma.done %s608, 1024
        $region52: #{tpu_custom_call.1} parent=47 // pred_fallthru
          _
      $region48: #{tpu_custom_call.1} parent=5 // pred_fallthru
        _
    $region6: #{tpu_custom_call.1} parent=1 // loop_footer
      %s22 = sadd.s32 1, %s18
    $region7: #{tpu_custom_call.1} parent=1 // loop_footer_branch
      %17 = sbr.rel target = $region3
    $region8: #{tpu_custom_call.1} parent=1 // loop_exit
      _
    %613 = vsyncpa [#allocation3], 1
    %s614 = scalar_lea.sflag [#allocation3], 1
    %615 = vsyncpa %s614, 1
    %616 = vsyncpa [#allocation6], 1
    %s617 = scalar_lea.sflag [#allocation6], 1
    %618 = vsyncpa %s617, 1
    %619 = vsyncpa [#allocation4], 1
    %s620 = scalar_lea.sflag [#allocation4], 1
    %621 = vsyncpa %s620, 1

</llo_original>
